<compile_context>
chip_gen: v7x
topology: tpu7x:2x2x1
jax: 0.10.0
libtpu: 0.0.40
codegen_flags: <defaults>
</compile_context>

<pallas_src>
import jax
import jax.numpy as jnp
from jax import lax
from jax.experimental import pallas as pl
from jax.experimental.pallas import tpu as pltpu

# ----------------------------- configuration --------------------------------
H, W = 64, 128          # rendered / reference image size (W = lane axis)
N_SAMPLES = 32          # Bezier curve samples
N_CIRCLE = 16           # points around the tube cross-section
K_VERTS = N_SAMPLES * N_CIRCLE          # 512 surface vertices
CHUNK = 16              # vertices per inner-loop trip (statically unrolled)
N_CHUNKS = K_VERTS // CHUNK             # 32 fori_loop trips
RADIUS = 0.01           # catheter tube radius (scene units)
SIGMA = 1.5             # splat std-dev in pixels (soft rasterizer)
FX = FY = 150.0         # pinhole intrinsics (stand-in for cam_K)
CX, CY = W / 2.0, H / 2.0
SHARPNESS = 20.0        # MaskLoss soft-binarization sharpness
THRESH = 0.5
INV2S2 = 1.0 / (2.0 * SIGMA * SIGMA)


# --------------------------- fused Pallas kernel -----------------------------
def _render_loss_kernel(u_ref, v_ref, ref_ref, loss_ref):
    """Soft render + MaskLoss, fully fused; writes sum((binary-ref)^2) to (1,1).

    u_ref  : (N_CHUNKS, CHUNK, 1) f32  projected u per vertex (column layout)
    v_ref  : (N_CHUNKS, 1, CHUNK) f32  projected v per vertex (row layout)
    ref_ref: (H, W) f32                reference binary mask
    loss_ref: (1, 1) f32               output partial sum
    """
    cols = lax.broadcasted_iota(jnp.int32, (1, W), 1).astype(jnp.float32)  # (1,W)
    rows = lax.broadcasted_iota(jnp.int32, (H, 1), 0).astype(jnp.float32)  # (H,1)

    def chunk_body(c, d2_min):
        u_col = u_ref[c]                      # (CHUNK, 1) lane-dense VMEM load
        v_row = v_ref[c]                      # (1, CHUNK)
        du = cols - u_col                     # (CHUNK, W)  all du rows at once
        du2 = du * du
        dv = rows - v_row                     # (H, CHUNK)  all dv cols at once
        dv2 = dv * dv
        # static unroll over the 16 vertices of the chunk: per vertex only the
        # irreducible broadcast-add + min on the full (H, W) tile remains.
        for j in range(CHUNK):
            d2 = du2[j:j + 1, :] + dv2[:, j:j + 1]      # (H, W)
            d2_min = jnp.minimum(d2_min, d2)
        return d2_min

    d2_min = lax.fori_loop(
        0, N_CHUNKS, chunk_body,
        jnp.full((H, W), 1e30, dtype=jnp.float32))

    # exp hoisted out of the loop: max_k exp(-d2_k/2s^2) == exp(-min_k d2_k/2s^2)
    alpha = jnp.exp(-INV2S2 * d2_min)
    # MaskLoss soft binarization (hand-rolled sigmoid: exp + divide only)
    binary = 1.0 / (1.0 + jnp.exp(-SHARPNESS * (alpha - THRESH)))
    diff = binary - ref_ref[...]
    diff2 = diff * diff

    # fused reduction: lane-sum then sublane-sum, store the (1,1) partial.
    col_sum = jnp.sum(diff2, axis=1, keepdims=True)           # (H, 1)
    loss_ref[...] = jnp.sum(col_sum, axis=0, keepdims=True)   # (1, 1)


def render_loss_sum(u, v, image_ref):
    """Fused soft render + MaskLoss. Returns the (1,1) sum of squared diffs."""
    u3 = u.reshape(N_CHUNKS, CHUNK, 1)
    v3 = v.reshape(N_CHUNKS, 1, CHUNK)
    return pl.pallas_call(
        _render_loss_kernel,
        grid=(1,),
        in_specs=[pl.BlockSpec((N_CHUNKS, CHUNK, 1), lambda i: (0, 0, 0)),
                  pl.BlockSpec((N_CHUNKS, 1, CHUNK), lambda i: (0, 0, 0)),
                  pl.BlockSpec((H, W), lambda i: (0, 0))],
        out_specs=pl.BlockSpec((1, 1), lambda i: (0, 0)),
        out_shape=jax.ShapeDtypeStruct((1, 1), jnp.float32),
        compiler_params=pltpu.CompilerParams(
            dimension_semantics=("arbitrary",)),
        cost_estimate=pl.CostEstimate(
            flops=3 * H * W * K_VERTS,          # add + min (+ setup) per pair
            transcendentals=2 * H * W,          # one exp pass + one sigmoid exp
            bytes_accessed=(H * W + 2 * K_VERTS + 1) * 4),
    )(u3, v3, image_ref)


# ------------------------------ JAX glue -------------------------------------
def bezier_surface_vertices(para, p_start):
    """ConstructionBezier.{getBezierCurve, getBezierTNB, getBezierSurface}."""
    p0 = p_start
    p1 = para[0:3]
    p2 = para[3:6]
    s = jnp.linspace(0.0, 1.0, N_SAMPLES, dtype=jnp.float32)[:, None]   # (N,1)
    pos = (1.0 - s) ** 2 * p0 + 2.0 * s * (1.0 - s) * p1 + s ** 2 * p2  # (N,3)
    der = 2.0 * (1.0 - s) * (p1 - p0) + 2.0 * s * (p2 - p1)             # (N,3)
    snd = jnp.broadcast_to(2.0 * (p2 - 2.0 * p1 + p0), pos.shape)       # (N,3)

    # TNB frame
    t = der / (jnp.linalg.norm(der, axis=-1, keepdims=True) + 1e-8)
    b = jnp.cross(der, snd)
    b = b / (jnp.linalg.norm(b, axis=-1, keepdims=True) + 1e-8)
    n = jnp.cross(b, t)

    # tube surface ("updated cylinder primitive vertices")
    theta = jnp.linspace(0.0, 2.0 * jnp.pi, N_CIRCLE,
                         endpoint=False, dtype=jnp.float32)
    ring = RADIUS * (jnp.cos(theta)[:, None, None] * n[None] +
                     jnp.sin(theta)[:, None, None] * b[None])   # (M,N,3)
    verts = pos[None, :, :] + ring                              # (M,N,3)
    return verts.reshape(-1, 3).astype(jnp.float32)             # (K,3)


def project(verts):
    """Pinhole projection (stand-in for cam_RT_H / cam_K)."""
    x, y, z = verts[:, 0], verts[:, 1], verts[:, 2]
    valid = z > 1e-3
    zc = jnp.maximum(z, 1e-3)
    # vertices at/behind the camera plane are pushed far off-image so they
    # never contribute a small distance in the splat kernel.
    u = jnp.where(valid, FX * x / zc + CX, -1e6)
    v = jnp.where(valid, FY * y / zc + CY, -1e6)
    return u.astype(jnp.float32), v.astype(jnp.float32)


@jax.jit
def diff_optimize_forward(para_init, p_start, image_ref):
    """Forward pass of DiffOptimizeModel: returns the scalar mask loss."""
    verts = bezier_surface_vertices(para_init, p_start)
    u, v = project(verts)
    loss_sum = render_loss_sum(u, v, image_ref)        # (1,1) fused in-kernel sum
    return loss_sum[0, 0] * (1.0 / (H * W))            # MSE mean


# --------------------- pure-JAX reference (check + image_ref) ----------------
def _min_d2_dense(u, v):
    cols = jnp.arange(W, dtype=jnp.float32)
    rows = jnp.arange(H, dtype=jnp.float32)
    du2 = (cols[None, :, None] - u[None, None, :]) ** 2          # (1,W,K)
    dv2 = (rows[:, None, None] - v[None, None, :]) ** 2          # (H,1,K)
    return jnp.min(du2 + dv2, axis=-1)                            # (H,W)


def reference_alpha(u, v):
    return jnp.exp(-INV2S2 * _min_d2_dense(u, v))


def reference_loss(para, p_start, image_ref):
    verts = bezier_surface_vertices(para, p_start)
    u, v = project(verts)
    alpha = reference_alpha(u, v)
    binary = 1.0 / (1.0 + jnp.exp(-SHARPNESS * (alpha - THRESH)))
    return jnp.mean((binary - image_ref) ** 2)


# --------------------------------- main --------------------------------------
if __name__ == "__main__":
    key = jax.random.PRNGKey(0)

    # deterministic parameters from the module's __init__
    para_init = jnp.array([0.01958988, 0.00195899, 0.09690406,
                           -0.03142905, -0.0031429, 0.18200866],
                          dtype=jnp.float32)
    p_start = jnp.array([0.02, 0.002, 0.10], dtype=jnp.float32)

    # deterministic reference mask (image_ref buffer): render a slightly
    # perturbed curve with the same (pure-JAX) pipeline and threshold it.
    delta = 0.002 * jax.random.normal(key, (6,), dtype=jnp.float32)
    verts_ref = bezier_surface_vertices(para_init + delta, p_start)
    u_r, v_r = project(verts_ref)
    image_ref = (reference_alpha(u_r, v_r) > 0.5).astype(jnp.float32)

    loss = diff_optimize_forward(para_init, p_start, image_ref)
    loss = jax.block_until_ready(loss)

    # numerical cross-check against the pure-JAX reference implementation
    loss_check = reference_loss(para_init, p_start, image_ref)
    assert loss.shape == ()
    assert bool(jnp.isfinite(loss))
    assert bool(jnp.allclose(loss, loss_check, rtol=1e-2, atol=1e-4)), (
        float(loss), float(loss_check))

    print("KERNEL_OK")
</pallas_src>

<mosaic_0001>
module attributes {stable_mosaic.version = 11 : i64} {
  func.func @_render_loss_kernel(%arg0: i32, %arg1: memref<32x16x1xf32, #tpu.memory_space<vmem>>, %arg2: memref<32x1x16xf32, #tpu.memory_space<vmem>>, %arg3: memref<64x128xf32, #tpu.memory_space<vmem>>, %arg4: memref<1x1xf32, #tpu.memory_space<vmem>>) attributes {dimension_semantics = [#tpu.dimension_semantics<arbitrary>], iteration_bounds = array<i64: 1>, scalar_prefetch = 0 : i64, scratch_operands = 0 : i64, tpu.core_type = #tpu.core_type<tc>, window_params = [{pipeline_mode = #tpu.pipeline_mode<synchronous>, transform_indices = @transform_0, window_bounds = array<i64: 32, 16, 1>}, {pipeline_mode = #tpu.pipeline_mode<synchronous>, transform_indices = @transform_1, window_bounds = array<i64: 32, 1, 16>}, {pipeline_mode = #tpu.pipeline_mode<synchronous>, transform_indices = @transform_2, window_bounds = array<i64: 64, 128>}, {pipeline_mode = #tpu.pipeline_mode<synchronous>, transform_indices = @transform_3, window_bounds = array<i64: 1, 1>}]} {
    %0 = tpu.iota {dimensions = array<i32: 1>} : vector<1x128xi32>
    %1 = arith.sitofp %0 : vector<1x128xi32> to vector<1x128xf32>
    %2 = tpu.iota {dimensions = array<i32: 0>} : vector<64x1xi32>
    %3 = arith.sitofp %2 : vector<64x1xi32> to vector<64x1xf32>
    %cst = arith.constant 1.000000e+30 : f32
    %4 = vector.broadcast %cst : f32 to vector<64x128xf32>
    %c0_i32 = arith.constant 0 : i32
    %c32_i32 = arith.constant 32 : i32
    %5 = arith.addi %c0_i32, %c32_i32 : i32
    %c1_i32 = arith.constant 1 : i32
    %6 = scf.for %arg5 = %c0_i32 to %5 step %c1_i32 iter_args(%arg6 = %4) -> (vector<64x128xf32>)  : i32 {
      %27 = arith.index_cast %arg5 : i32 to index
      %c0_11 = arith.constant 0 : index
      %c0_12 = arith.constant 0 : index
      %28 = vector.load %arg1[%27, %c0_11, %c0_12] : memref<32x16x1xf32, #tpu.memory_space<vmem>>, vector<1x16x1xf32>
      %29 = vector.shape_cast %28 : vector<1x16x1xf32> to vector<16x1xf32>
      %30 = arith.index_cast %arg5 : i32 to index
      %c0_13 = arith.constant 0 : index
      %c0_14 = arith.constant 0 : index
      %31 = vector.load %arg2[%30, %c0_13, %c0_14] : memref<32x1x16xf32, #tpu.memory_space<vmem>>, vector<1x1x16xf32>
      %32 = vector.shape_cast %31 : vector<1x1x16xf32> to vector<1x16xf32>
      %33 = vector.broadcast %1 : vector<1x128xf32> to vector<16x128xf32>
      %34 = vector.broadcast %29 : vector<16x1xf32> to vector<16x128xf32>
      %35 = arith.subf %33, %34 : vector<16x128xf32>
      %36 = arith.mulf %35, %35 : vector<16x128xf32>
      %37 = vector.broadcast %3 : vector<64x1xf32> to vector<64x16xf32>
      %38 = vector.broadcast %32 : vector<1x16xf32> to vector<64x16xf32>
      %39 = arith.subf %37, %38 : vector<64x16xf32>
      %40 = arith.mulf %39, %39 : vector<64x16xf32>
      %41 = vector.extract_strided_slice %36 {offsets = [0, 0], sizes = [1, 128], strides = [1, 1]} : vector<16x128xf32> to vector<1x128xf32>
      %42 = vector.extract_strided_slice %40 {offsets = [0, 0], sizes = [64, 1], strides = [1, 1]} : vector<64x16xf32> to vector<64x1xf32>
      %43 = vector.broadcast %41 : vector<1x128xf32> to vector<64x128xf32>
      %44 = vector.broadcast %42 : vector<64x1xf32> to vector<64x128xf32>
      %45 = arith.addf %43, %44 : vector<64x128xf32>
      %46 = arith.minimumf %arg6, %45 : vector<64x128xf32>
      %47 = vector.extract_strided_slice %36 {offsets = [1, 0], sizes = [1, 128], strides = [1, 1]} : vector<16x128xf32> to vector<1x128xf32>
      %48 = vector.extract_strided_slice %40 {offsets = [0, 1], sizes = [64, 1], strides = [1, 1]} : vector<64x16xf32> to vector<64x1xf32>
      %49 = vector.broadcast %47 : vector<1x128xf32> to vector<64x128xf32>
      %50 = vector.broadcast %48 : vector<64x1xf32> to vector<64x128xf32>
      %51 = arith.addf %49, %50 : vector<64x128xf32>
      %52 = arith.minimumf %46, %51 : vector<64x128xf32>
      %53 = vector.extract_strided_slice %36 {offsets = [2, 0], sizes = [1, 128], strides = [1, 1]} : vector<16x128xf32> to vector<1x128xf32>
      %54 = vector.extract_strided_slice %40 {offsets = [0, 2], sizes = [64, 1], strides = [1, 1]} : vector<64x16xf32> to vector<64x1xf32>
      %55 = vector.broadcast %53 : vector<1x128xf32> to vector<64x128xf32>
      %56 = vector.broadcast %54 : vector<64x1xf32> to vector<64x128xf32>
      %57 = arith.addf %55, %56 : vector<64x128xf32>
      %58 = arith.minimumf %52, %57 : vector<64x128xf32>
      %59 = vector.extract_strided_slice %36 {offsets = [3, 0], sizes = [1, 128], strides = [1, 1]} : vector<16x128xf32> to vector<1x128xf32>
      %60 = vector.extract_strided_slice %40 {offsets = [0, 3], sizes = [64, 1], strides = [1, 1]} : vector<64x16xf32> to vector<64x1xf32>
      %61 = vector.broadcast %59 : vector<1x128xf32> to vector<64x128xf32>
      %62 = vector.broadcast %60 : vector<64x1xf32> to vector<64x128xf32>
      %63 = arith.addf %61, %62 : vector<64x128xf32>
      %64 = arith.minimumf %58, %63 : vector<64x128xf32>
      %65 = vector.extract_strided_slice %36 {offsets = [4, 0], sizes = [1, 128], strides = [1, 1]} : vector<16x128xf32> to vector<1x128xf32>
      %66 = vector.extract_strided_slice %40 {offsets = [0, 4], sizes = [64, 1], strides = [1, 1]} : vector<64x16xf32> to vector<64x1xf32>
      %67 = vector.broadcast %65 : vector<1x128xf32> to vector<64x128xf32>
      %68 = vector.broadcast %66 : vector<64x1xf32> to vector<64x128xf32>
      %69 = arith.addf %67, %68 : vector<64x128xf32>
      %70 = arith.minimumf %64, %69 : vector<64x128xf32>
      %71 = vector.extract_strided_slice %36 {offsets = [5, 0], sizes = [1, 128], strides = [1, 1]} : vector<16x128xf32> to vector<1x128xf32>
      %72 = vector.extract_strided_slice %40 {offsets = [0, 5], sizes = [64, 1], strides = [1, 1]} : vector<64x16xf32> to vector<64x1xf32>
      %73 = vector.broadcast %71 : vector<1x128xf32> to vector<64x128xf32>
      %74 = vector.broadcast %72 : vector<64x1xf32> to vector<64x128xf32>
      %75 = arith.addf %73, %74 : vector<64x128xf32>
      %76 = arith.minimumf %70, %75 : vector<64x128xf32>
      %77 = vector.extract_strided_slice %36 {offsets = [6, 0], sizes = [1, 128], strides = [1, 1]} : vector<16x128xf32> to vector<1x128xf32>
      %78 = vector.extract_strided_slice %40 {offsets = [0, 6], sizes = [64, 1], strides = [1, 1]} : vector<64x16xf32> to vector<64x1xf32>
      %79 = vector.broadcast %77 : vector<1x128xf32> to vector<64x128xf32>
      %80 = vector.broadcast %78 : vector<64x1xf32> to vector<64x128xf32>
      %81 = arith.addf %79, %80 : vector<64x128xf32>
      %82 = arith.minimumf %76, %81 : vector<64x128xf32>
      %83 = vector.extract_strided_slice %36 {offsets = [7, 0], sizes = [1, 128], strides = [1, 1]} : vector<16x128xf32> to vector<1x128xf32>
      %84 = vector.extract_strided_slice %40 {offsets = [0, 7], sizes = [64, 1], strides = [1, 1]} : vector<64x16xf32> to vector<64x1xf32>
      %85 = vector.broadcast %83 : vector<1x128xf32> to vector<64x128xf32>
      %86 = vector.broadcast %84 : vector<64x1xf32> to vector<64x128xf32>
      %87 = arith.addf %85, %86 : vector<64x128xf32>
      %88 = arith.minimumf %82, %87 : vector<64x128xf32>
      %89 = vector.extract_strided_slice %36 {offsets = [8, 0], sizes = [1, 128], strides = [1, 1]} : vector<16x128xf32> to vector<1x128xf32>
      %90 = vector.extract_strided_slice %40 {offsets = [0, 8], sizes = [64, 1], strides = [1, 1]} : vector<64x16xf32> to vector<64x1xf32>
      %91 = vector.broadcast %89 : vector<1x128xf32> to vector<64x128xf32>
      %92 = vector.broadcast %90 : vector<64x1xf32> to vector<64x128xf32>
      %93 = arith.addf %91, %92 : vector<64x128xf32>
      %94 = arith.minimumf %88, %93 : vector<64x128xf32>
      %95 = vector.extract_strided_slice %36 {offsets = [9, 0], sizes = [1, 128], strides = [1, 1]} : vector<16x128xf32> to vector<1x128xf32>
      %96 = vector.extract_strided_slice %40 {offsets = [0, 9], sizes = [64, 1], strides = [1, 1]} : vector<64x16xf32> to vector<64x1xf32>
      %97 = vector.broadcast %95 : vector<1x128xf32> to vector<64x128xf32>
      %98 = vector.broadcast %96 : vector<64x1xf32> to vector<64x128xf32>
      %99 = arith.addf %97, %98 : vector<64x128xf32>
      %100 = arith.minimumf %94, %99 : vector<64x128xf32>
      %101 = vector.extract_strided_slice %36 {offsets = [10, 0], sizes = [1, 128], strides = [1, 1]} : vector<16x128xf32> to vector<1x128xf32>
      %102 = vector.extract_strided_slice %40 {offsets = [0, 10], sizes = [64, 1], strides = [1, 1]} : vector<64x16xf32> to vector<64x1xf32>
      %103 = vector.broadcast %101 : vector<1x128xf32> to vector<64x128xf32>
      %104 = vector.broadcast %102 : vector<64x1xf32> to vector<64x128xf32>
      %105 = arith.addf %103, %104 : vector<64x128xf32>
      %106 = arith.minimumf %100, %105 : vector<64x128xf32>
      %107 = vector.extract_strided_slice %36 {offsets = [11, 0], sizes = [1, 128], strides = [1, 1]} : vector<16x128xf32> to vector<1x128xf32>
      %108 = vector.extract_strided_slice %40 {offsets = [0, 11], sizes = [64, 1], strides = [1, 1]} : vector<64x16xf32> to vector<64x1xf32>
      %109 = vector.broadcast %107 : vector<1x128xf32> to vector<64x128xf32>
      %110 = vector.broadcast %108 : vector<64x1xf32> to vector<64x128xf32>
      %111 = arith.addf %109, %110 : vector<64x128xf32>
      %112 = arith.minimumf %106, %111 : vector<64x128xf32>
      %113 = vector.extract_strided_slice %36 {offsets = [12, 0], sizes = [1, 128], strides = [1, 1]} : vector<16x128xf32> to vector<1x128xf32>
      %114 = vector.extract_strided_slice %40 {offsets = [0, 12], sizes = [64, 1], strides = [1, 1]} : vector<64x16xf32> to vector<64x1xf32>
      %115 = vector.broadcast %113 : vector<1x128xf32> to vector<64x128xf32>
      %116 = vector.broadcast %114 : vector<64x1xf32> to vector<64x128xf32>
      %117 = arith.addf %115, %116 : vector<64x128xf32>
      %118 = arith.minimumf %112, %117 : vector<64x128xf32>
      %119 = vector.extract_strided_slice %36 {offsets = [13, 0], sizes = [1, 128], strides = [1, 1]} : vector<16x128xf32> to vector<1x128xf32>
      %120 = vector.extract_strided_slice %40 {offsets = [0, 13], sizes = [64, 1], strides = [1, 1]} : vector<64x16xf32> to vector<64x1xf32>
      %121 = vector.broadcast %119 : vector<1x128xf32> to vector<64x128xf32>
      %122 = vector.broadcast %120 : vector<64x1xf32> to vector<64x128xf32>
      %123 = arith.addf %121, %122 : vector<64x128xf32>
      %124 = arith.minimumf %118, %123 : vector<64x128xf32>
      %125 = vector.extract_strided_slice %36 {offsets = [14, 0], sizes = [1, 128], strides = [1, 1]} : vector<16x128xf32> to vector<1x128xf32>
      %126 = vector.extract_strided_slice %40 {offsets = [0, 14], sizes = [64, 1], strides = [1, 1]} : vector<64x16xf32> to vector<64x1xf32>
      %127 = vector.broadcast %125 : vector<1x128xf32> to vector<64x128xf32>
      %128 = vector.broadcast %126 : vector<64x1xf32> to vector<64x128xf32>
      %129 = arith.addf %127, %128 : vector<64x128xf32>
      %130 = arith.minimumf %124, %129 : vector<64x128xf32>
      %131 = vector.extract_strided_slice %36 {offsets = [15, 0], sizes = [1, 128], strides = [1, 1]} : vector<16x128xf32> to vector<1x128xf32>
      %132 = vector.extract_strided_slice %40 {offsets = [0, 15], sizes = [64, 1], strides = [1, 1]} : vector<64x16xf32> to vector<64x1xf32>
      %133 = vector.broadcast %131 : vector<1x128xf32> to vector<64x128xf32>
      %134 = vector.broadcast %132 : vector<64x1xf32> to vector<64x128xf32>
      %135 = arith.addf %133, %134 : vector<64x128xf32>
      %136 = arith.minimumf %130, %135 : vector<64x128xf32>
      scf.yield %136 : vector<64x128xf32>
    }
    %c32_i32_0 = arith.constant 32 : i32
    %cst_1 = arith.constant -0.222222224 : f32
    %7 = vector.broadcast %cst_1 : f32 to vector<64x128xf32>
    %8 = arith.mulf %7, %6 : vector<64x128xf32>
    %9 = math.exp %8 : vector<64x128xf32>
    %cst_2 = arith.constant 5.000000e-01 : f32
    %10 = vector.broadcast %cst_2 : f32 to vector<64x128xf32>
    %11 = arith.subf %9, %10 : vector<64x128xf32>
    %cst_3 = arith.constant -2.000000e+01 : f32
    %12 = vector.broadcast %cst_3 : f32 to vector<64x128xf32>
    %13 = arith.mulf %12, %11 : vector<64x128xf32>
    %14 = math.exp %13 : vector<64x128xf32>
    %cst_4 = arith.constant 1.000000e+00 : f32
    %15 = vector.broadcast %cst_4 : f32 to vector<64x128xf32>
    %16 = arith.addf %15, %14 : vector<64x128xf32>
    %cst_5 = arith.constant 1.000000e+00 : f32
    %17 = vector.broadcast %cst_5 : f32 to vector<64x128xf32>
    %18 = arith.divf %17, %16 : vector<64x128xf32>
    %c0 = arith.constant 0 : index
    %c0_6 = arith.constant 0 : index
    %19 = vector.load %arg3[%c0, %c0_6] : memref<64x128xf32, #tpu.memory_space<vmem>>, vector<64x128xf32>
    %20 = arith.subf %18, %19 : vector<64x128xf32>
    %21 = arith.mulf %20, %20 : vector<64x128xf32>
    %cst_7 = arith.constant dense<0.000000e+00> : vector<64xf32>
    %22 = vector.multi_reduction <add>, %21, %cst_7 [1] : vector<64x128xf32> to vector<64xf32>
    %23 = vector.shape_cast %22 : vector<64xf32> to vector<64x1xf32>
    %cst_8 = arith.constant dense<0.000000e+00> : vector<1xf32>
    %24 = vector.multi_reduction <add>, %23, %cst_8 [0] : vector<64x1xf32> to vector<1xf32>
    %25 = vector.shape_cast %24 : vector<1xf32> to vector<1x1xf32>
    %c0_9 = arith.constant 0 : index
    %c0_10 = arith.constant 0 : index
    %26 = vector.load %arg4[%c0_9, %c0_10] : memref<1x1xf32, #tpu.memory_space<vmem>>, vector<1x1xf32>
    tpu.vector_store %arg4[%c0_9, %c0_10], %25 {strides = array<i32>} : memref<1x1xf32, #tpu.memory_space<vmem>>, vector<1x1xf32>,
    return
  }
  func.func @transform_0(%arg0: i32) -> (i32, i32, i32) {
    %c0_i32 = arith.constant 0 : i32
    %c0_i32_0 = arith.constant 0 : i32
    %c0_i32_1 = arith.constant 0 : i32
    %c0_i32_2 = arith.constant 0 : i32
    return %c0_i32, %c0_i32_0, %c0_i32_1 : i32, i32, i32
  }
  func.func @transform_1(%arg0: i32) -> (i32, i32, i32) {
    %c0_i32 = arith.constant 0 : i32
    %c0_i32_0 = arith.constant 0 : i32
    %c0_i32_1 = arith.constant 0 : i32
    %c0_i32_2 = arith.constant 0 : i32
    return %c0_i32, %c0_i32_0, %c0_i32_1 : i32, i32, i32
  }
  func.func @transform_2(%arg0: i32) -> (i32, i32) {
    %c0_i32 = arith.constant 0 : i32
    %c0_i32_0 = arith.constant 0 : i32
    %c0_i32_1 = arith.constant 0 : i32
    return %c0_i32, %c0_i32_0 : i32, i32
  }
  func.func @transform_3(%arg0: i32) -> (i32, i32) {
    %c0_i32 = arith.constant 0 : i32
    %c0_i32_0 = arith.constant 0 : i32
    %c0_i32_1 = arith.constant 0 : i32
    return %c0_i32, %c0_i32_0 : i32, i32
  }
}

</mosaic_0001>

<llo_original>
// kernel: diff_optimize_forward.1
$region0: #{diff_optimize_forward.1}
  #allocation0 [shape = 'u32[]', space=smem, size = 0x4, offset = 0x4, fixed_abs, tag = 'smem constant byte address 0x4 - core index']
  #allocation1 [shape = 'u32[144,128]{1,0:T(1,128)}', space=vmem, size = 0x12000, scoped, tag = 'internal scratch']
  %s0 = inlined_call_operand.vmem [shape: f32[32,16,1], index: 0, kind: input, shape index: {}]
  %s1 = inlined_call_operand.vmem [shape: f32[32,1,16], index: 1, kind: input, shape index: {}]
  %s2 = inlined_call_operand.vmem [shape: f32[64,128], index: 2, kind: input, shape index: {}]
  %s3 = inlined_call_operand.hbm [shape: f32[1,1], index: 3, kind: output, shape index: {}]
  %s4 = sld [smem:[#allocation0]]
  $region29: #{diff_optimize_forward.1} parent=0
    _
  %s6 = ssub.s32 1, %s4
  %s7 = scalar_select 0, %s6, %s4
  $region1: #{diff_optimize_forward.1} parent=0
    #allocation2 [shape = 'u8[512]{0}', space=vmem, size = 0x400, scoped, tag = 'output window, operand 0, single buffered']
    #allocation3 [shape = 's32[1]{0}', space=sflag, size = 0x4, scoped, tag = 'scoped memory for diff_optimize_forward.1']
    %8 = vsyncpa [#allocation3], 0
    // Predicated region
    $region2: #{diff_optimize_forward.1} parent=1 // pred_check
      _
    $region3: #{diff_optimize_forward.1} parent=1 // pred_check_branch
      %10 = sbr.rel (0) target = $region5
    $region4: #{diff_optimize_forward.1} parent=1 // pred_region
      _
    $region5: #{diff_optimize_forward.1} parent=1 // pred_fallthru
      _
    // Predicated region
    $region6: #{diff_optimize_forward.1} parent=1 // pred_check
      _
    $region7: #{diff_optimize_forward.1} parent=1 // pred_check_branch
      %12 = sbr.rel (0) target = $region9
    $region8: #{diff_optimize_forward.1} parent=1 // pred_region
      _
    $region9: #{diff_optimize_forward.1} parent=1 // pred_fallthru
      _
    // Predicated region
    $region10: #{diff_optimize_forward.1} parent=1 // pred_check
      _
    $region11: #{diff_optimize_forward.1} parent=1 // pred_check_branch
      %14 = sbr.rel (0) target = $region13
    $region12: #{diff_optimize_forward.1} parent=1 // pred_region
      _
    $region13: #{diff_optimize_forward.1} parent=1 // pred_fallthru
      _
    %v15 = vlaneseq
    %v16 = vand.u32 %v15, 127
    %v17 = vcvt.s32.f32 %v16
    %v18 = vlaneseq
    %v19 = vshrl.u32 %v18, 7
    %v20 = vadd.s32 %v19, 8
    %v21 = vadd.s32 %v19, 16
    %v22 = vadd.s32 %v19, 24
    %v23 = vadd.s32 %v19, 32
    %v24 = vadd.s32 %v19, 40
    %v25 = vadd.s32 %v19, 48
    %v26 = vadd.s32 %v19, 56
    %v27 = vcvt.s32.f32 %v19
    %v28 = vcvt.s32.f32 %v20
    %v29 = vcvt.s32.f32 %v21
    %v30 = vcvt.s32.f32 %v22
    %v31 = vcvt.s32.f32 %v23
    %v32 = vcvt.s32.f32 %v24
    %v33 = vcvt.s32.f32 %v25
    %v34 = vcvt.s32.f32 %v26
    loop: start=0, step=1, limit=32
    $region14: #{diff_optimize_forward.1} parent=1 // loop_pre_header
      _
    $region15: #{diff_optimize_forward.1} parent=1 // loop_header
      %s36 = sphi 0, %s40
      %p37 = scmp.ge.s32.totalorder %s36, 32
      %v41 = vphi 1e+30, %v923
      %v42 = vphi 1e+30, %v924
      %v43 = vphi 1e+30, %v925
      %v44 = vphi 1e+30, %v926
      %v45 = vphi 1e+30, %v927
      %v46 = vphi 1e+30, %v928
      %v47 = vphi 1e+30, %v929
      %v48 = vphi 1e+30, %v930
    $region16: #{diff_optimize_forward.1} parent=1 // loop_header_branch
      %39 = sbr.rel (%p37) target = $region20
    $region17: #{diff_optimize_forward.1} parent=1 // loop_body
      %s49 = smul.u32 %s36, 16
      %s50 = scalar_lea.vmem %s0, %s49
      %v51 = vld [vmem:[%s50] sm:$0xff]
      %v52 = vld [vmem:[%s50 + $0x8] sm:$0xff]
      %s53 = scalar_lea.vmem %s1, %s36
      %v54 = vld [vmem:[%s53] sm:$0x1]
      %56 = vset.pattern.permute.xlu0 0
      %57 = vperm.xlu0 %56, %v51
      %v58 = vpop.permute.xlu0 %57
      %61 = vset.pattern.permute.xlu0 0
      %62 = vperm.xlu0 %61, %v52
      %v63 = vpop.permute.xlu0 %62
      %v65 = vsub.f32 %v17, %v58
      %v66 = vsub.f32 %v17, %v63
      %v67 = vmul.f32 %v65, %v65
      %v68 = vmul.f32 %v66, %v66
      %v70 = vlaneseq
      %v71 = vshrl.u32 %v70, 7
      %v72 = vsub.s32 0, %v71
      %v73 = vrot.slane %v54, %v72
      %v75 = vsub.f32 %v27, %v73
      %v76 = vsub.f32 %v28, %v73
      %v77 = vsub.f32 %v29, %v73
      %v78 = vsub.f32 %v30, %v73
      %v79 = vsub.f32 %v31, %v73
      %v80 = vsub.f32 %v32, %v73
      %v81 = vsub.f32 %v33, %v73
      %v82 = vsub.f32 %v34, %v73
      %v83 = vmul.f32 %v75, %v75
      %v84 = vmul.f32 %v76, %v76
      %v85 = vmul.f32 %v77, %v77
      %v86 = vmul.f32 %v78, %v78
      %v87 = vmul.f32 %v79, %v79
      %v88 = vmul.f32 %v80, %v80
      %v89 = vmul.f32 %v81, %v81
      %v90 = vmul.f32 %v82, %v82
      %v91 = vlaneseq
      %v92 = vshrl.u32 %v91, 7
      %v93 = vsub.s32 0, %v92
      %v94 = vrot.slane %v67, %v93
      %96 = vset.pattern.permute.xlu0 0
      %97 = vperm.xlu0 %96, %v83
      %v98 = vpop.permute.xlu0 %97
      %101 = vset.pattern.permute.xlu0 0
      %102 = vperm.xlu0 %101, %v84
      %v103 = vpop.permute.xlu0 %102
      %106 = vset.pattern.permute.xlu0 0
      %107 = vperm.xlu0 %106, %v85
      %v108 = vpop.permute.xlu0 %107
      %111 = vset.pattern.permute.xlu0 0
      %112 = vperm.xlu0 %111, %v86
      %v113 = vpop.permute.xlu0 %112
      %116 = vset.pattern.permute.xlu0 0
      %117 = vperm.xlu0 %116, %v87
      %v118 = vpop.permute.xlu0 %117
      %121 = vset.pattern.permute.xlu0 0
      %122 = vperm.xlu0 %121, %v88
      %v123 = vpop.permute.xlu0 %122
      %126 = vset.pattern.permute.xlu0 0
      %127 = vperm.xlu0 %126, %v89
      %v128 = vpop.permute.xlu0 %127
      %131 = vset.pattern.permute.xlu0 0
      %132 = vperm.xlu0 %131, %v90
      %v133 = vpop.permute.xlu0 %132
      %v135 = vadd.f32 %v94, %v98
      %v136 = vadd.f32 %v94, %v103
      %v137 = vadd.f32 %v94, %v108
      %v138 = vadd.f32 %v94, %v113
      %v139 = vadd.f32 %v94, %v118
      %v140 = vadd.f32 %v94, %v123
      %v141 = vadd.f32 %v94, %v128
      %v142 = vadd.f32 %v94, %v133
      %v143 = vmin.f32 %v41, %v135
      %v144 = vmin.f32 %v42, %v136
      %v145 = vmin.f32 %v43, %v137
      %v146 = vmin.f32 %v44, %v138
      %v147 = vmin.f32 %v45, %v139
      %v148 = vmin.f32 %v46, %v140
      %v149 = vmin.f32 %v47, %v141
      %v150 = vmin.f32 %v48, %v142
      %v151 = vlaneseq
      %v152 = vshrl.u32 %v151, 7
      %v153 = vsub.s32 1, %v152
      %v154 = vrot.slane %v67, %v153
      %155 = vset.pattern.permute.xlu0 1
      %156 = vperm.xlu0 %155, %v83
      %v157 = vpop.permute.xlu0 %156
      %159 = vset.pattern.permute.xlu0 1
      %160 = vperm.xlu0 %159, %v84
      %v161 = vpop.permute.xlu0 %160
      %163 = vset.pattern.permute.xlu0 1
      %164 = vperm.xlu0 %163, %v85
      %v165 = vpop.permute.xlu0 %164
      %167 = vset.pattern.permute.xlu0 1
      %168 = vperm.xlu0 %167, %v86
      %v169 = vpop.permute.xlu0 %168
      %171 = vset.pattern.permute.xlu0 1
      %172 = vperm.xlu0 %171, %v87
      %v173 = vpop.permute.xlu0 %172
      %175 = vset.pattern.permute.xlu0 1
      %176 = vperm.xlu0 %175, %v88
      %v177 = vpop.permute.xlu0 %176
      %179 = vset.pattern.permute.xlu0 1
      %180 = vperm.xlu0 %179, %v89
      %v181 = vpop.permute.xlu0 %180
      %183 = vset.pattern.permute.xlu0 1
      %184 = vperm.xlu0 %183, %v90
      %v185 = vpop.permute.xlu0 %184
      %v187 = vadd.f32 %v154, %v157
      %v188 = vadd.f32 %v154, %v161
      %v189 = vadd.f32 %v154, %v165
      %v190 = vadd.f32 %v154, %v169
      %v191 = vadd.f32 %v154, %v173
      %v192 = vadd.f32 %v154, %v177
      %v193 = vadd.f32 %v154, %v181
      %v194 = vadd.f32 %v154, %v185
      %v195 = vmin.f32 %v143, %v187
      %v196 = vmin.f32 %v144, %v188
      %v197 = vmin.f32 %v145, %v189
      %v198 = vmin.f32 %v146, %v190
      %v199 = vmin.f32 %v147, %v191
      %v200 = vmin.f32 %v148, %v192
      %v201 = vmin.f32 %v149, %v193
      %v202 = vmin.f32 %v150, %v194
      %v203 = vlaneseq
      %v204 = vshrl.u32 %v203, 7
      %v205 = vsub.s32 2, %v204
      %v206 = vrot.slane %v67, %v205
      %207 = vset.pattern.permute.xlu0 2
      %208 = vperm.xlu0 %207, %v83
      %v209 = vpop.permute.xlu0 %208
      %211 = vset.pattern.permute.xlu0 2
      %212 = vperm.xlu0 %211, %v84
      %v213 = vpop.permute.xlu0 %212
      %215 = vset.pattern.permute.xlu0 2
      %216 = vperm.xlu0 %215, %v85
      %v217 = vpop.permute.xlu0 %216
      %219 = vset.pattern.permute.xlu0 2
      %220 = vperm.xlu0 %219, %v86
      %v221 = vpop.permute.xlu0 %220
      %223 = vset.pattern.permute.xlu0 2
      %224 = vperm.xlu0 %223, %v87
      %v225 = vpop.permute.xlu0 %224
      %227 = vset.pattern.permute.xlu0 2
      %228 = vperm.xlu0 %227, %v88
      %v229 = vpop.permute.xlu0 %228
      %231 = vset.pattern.permute.xlu0 2
      %232 = vperm.xlu0 %231, %v89
      %v233 = vpop.permute.xlu0 %232
      %235 = vset.pattern.permute.xlu0 2
      %236 = vperm.xlu0 %235, %v90
      %v237 = vpop.permute.xlu0 %236
      %v239 = vadd.f32 %v206, %v209
      %v240 = vadd.f32 %v206, %v213
      %v241 = vadd.f32 %v206, %v217
      %v242 = vadd.f32 %v206, %v221
      %v243 = vadd.f32 %v206, %v225
      %v244 = vadd.f32 %v206, %v229
      %v245 = vadd.f32 %v206, %v233
      %v246 = vadd.f32 %v206, %v237
      %v247 = vmin.f32 %v195, %v239
      %v248 = vmin.f32 %v196, %v240
      %v249 = vmin.f32 %v197, %v241
      %v250 = vmin.f32 %v198, %v242
      %v251 = vmin.f32 %v199, %v243
      %v252 = vmin.f32 %v200, %v244
      %v253 = vmin.f32 %v201, %v245
      %v254 = vmin.f32 %v202, %v246
      %v255 = vlaneseq
      %v256 = vshrl.u32 %v255, 7
      %v257 = vsub.s32 3, %v256
      %v258 = vrot.slane %v67, %v257
      %259 = vset.pattern.permute.xlu0 3
      %260 = vperm.xlu0 %259, %v83
      %v261 = vpop.permute.xlu0 %260
      %263 = vset.pattern.permute.xlu0 3
      %264 = vperm.xlu0 %263, %v84
      %v265 = vpop.permute.xlu0 %264
      %267 = vset.pattern.permute.xlu0 3
      %268 = vperm.xlu0 %267, %v85
      %v269 = vpop.permute.xlu0 %268
      %271 = vset.pattern.permute.xlu0 3
      %272 = vperm.xlu0 %271, %v86
      %v273 = vpop.permute.xlu0 %272
      %275 = vset.pattern.permute.xlu0 3
      %276 = vperm.xlu0 %275, %v87
      %v277 = vpop.permute.xlu0 %276
      %279 = vset.pattern.permute.xlu0 3
      %280 = vperm.xlu0 %279, %v88
      %v281 = vpop.permute.xlu0 %280
      %283 = vset.pattern.permute.xlu0 3
      %284 = vperm.xlu0 %283, %v89
      %v285 = vpop.permute.xlu0 %284
      %287 = vset.pattern.permute.xlu0 3
      %288 = vperm.xlu0 %287, %v90
      %v289 = vpop.permute.xlu0 %288
      %v291 = vadd.f32 %v258, %v261
      %v292 = vadd.f32 %v258, %v265
      %v293 = vadd.f32 %v258, %v269
      %v294 = vadd.f32 %v258, %v273
      %v295 = vadd.f32 %v258, %v277
      %v296 = vadd.f32 %v258, %v281
      %v297 = vadd.f32 %v258, %v285
      %v298 = vadd.f32 %v258, %v289
      %v299 = vmin.f32 %v247, %v291
      %v300 = vmin.f32 %v248, %v292
      %v301 = vmin.f32 %v249, %v293
      %v302 = vmin.f32 %v250, %v294
      %v303 = vmin.f32 %v251, %v295
      %v304 = vmin.f32 %v252, %v296
      %v305 = vmin.f32 %v253, %v297
      %v306 = vmin.f32 %v254, %v298
      %v307 = vlaneseq
      %v308 = vshrl.u32 %v307, 7
      %v309 = vsub.s32 4, %v308
      %v310 = vrot.slane %v67, %v309
      %311 = vset.pattern.permute.xlu0 4
      %312 = vperm.xlu0 %311, %v83
      %v313 = vpop.permute.xlu0 %312
      %315 = vset.pattern.permute.xlu0 4
      %316 = vperm.xlu0 %315, %v84
      %v317 = vpop.permute.xlu0 %316
      %319 = vset.pattern.permute.xlu0 4
      %320 = vperm.xlu0 %319, %v85
      %v321 = vpop.permute.xlu0 %320
      %323 = vset.pattern.permute.xlu0 4
      %324 = vperm.xlu0 %323, %v86
      %v325 = vpop.permute.xlu0 %324
      %327 = vset.pattern.permute.xlu0 4
      %328 = vperm.xlu0 %327, %v87
      %v329 = vpop.permute.xlu0 %328
      %331 = vset.pattern.permute.xlu0 4
      %332 = vperm.xlu0 %331, %v88
      %v333 = vpop.permute.xlu0 %332
      %335 = vset.pattern.permute.xlu0 4
      %336 = vperm.xlu0 %335, %v89
      %v337 = vpop.permute.xlu0 %336
      %339 = vset.pattern.permute.xlu0 4
      %340 = vperm.xlu0 %339, %v90
      %v341 = vpop.permute.xlu0 %340
      %v343 = vadd.f32 %v310, %v313
      %v344 = vadd.f32 %v310, %v317
      %v345 = vadd.f32 %v310, %v321
      %v346 = vadd.f32 %v310, %v325
      %v347 = vadd.f32 %v310, %v329
      %v348 = vadd.f32 %v310, %v333
      %v349 = vadd.f32 %v310, %v337
      %v350 = vadd.f32 %v310, %v341
      %v351 = vmin.f32 %v299, %v343
      %v352 = vmin.f32 %v300, %v344
      %v353 = vmin.f32 %v301, %v345
      %v354 = vmin.f32 %v302, %v346
      %v355 = vmin.f32 %v303, %v347
      %v356 = vmin.f32 %v304, %v348
      %v357 = vmin.f32 %v305, %v349
      %v358 = vmin.f32 %v306, %v350
      %v359 = vlaneseq
      %v360 = vshrl.u32 %v359, 7
      %v361 = vsub.s32 5, %v360
      %v362 = vrot.slane %v67, %v361
      %363 = vset.pattern.permute.xlu0 5
      %364 = vperm.xlu0 %363, %v83
      %v365 = vpop.permute.xlu0 %364
      %367 = vset.pattern.permute.xlu0 5
      %368 = vperm.xlu0 %367, %v84
      %v369 = vpop.permute.xlu0 %368
      %371 = vset.pattern.permute.xlu0 5
      %372 = vperm.xlu0 %371, %v85
      %v373 = vpop.permute.xlu0 %372
      %375 = vset.pattern.permute.xlu0 5
      %376 = vperm.xlu0 %375, %v86
      %v377 = vpop.permute.xlu0 %376
      %379 = vset.pattern.permute.xlu0 5
      %380 = vperm.xlu0 %379, %v87
      %v381 = vpop.permute.xlu0 %380
      %383 = vset.pattern.permute.xlu0 5
      %384 = vperm.xlu0 %383, %v88
      %v385 = vpop.permute.xlu0 %384
      %387 = vset.pattern.permute.xlu0 5
      %388 = vperm.xlu0 %387, %v89
      %v389 = vpop.permute.xlu0 %388
      %391 = vset.pattern.permute.xlu0 5
      %392 = vperm.xlu0 %391, %v90
      %v393 = vpop.permute.xlu0 %392
      %v395 = vadd.f32 %v362, %v365
      %v396 = vadd.f32 %v362, %v369
      %v397 = vadd.f32 %v362, %v373
      %v398 = vadd.f32 %v362, %v377
      %v399 = vadd.f32 %v362, %v381
      %v400 = vadd.f32 %v362, %v385
      %v401 = vadd.f32 %v362, %v389
      %v402 = vadd.f32 %v362, %v393
      %v403 = vmin.f32 %v351, %v395
      %v404 = vmin.f32 %v352, %v396
      %v405 = vmin.f32 %v353, %v397
      %v406 = vmin.f32 %v354, %v398
      %v407 = vmin.f32 %v355, %v399
      %v408 = vmin.f32 %v356, %v400
      %v409 = vmin.f32 %v357, %v401
      %v410 = vmin.f32 %v358, %v402
      %v411 = vlaneseq
      %v412 = vshrl.u32 %v411, 7
      %v413 = vsub.s32 6, %v412
      %v414 = vrot.slane %v67, %v413
      %415 = vset.pattern.permute.xlu0 6
      %416 = vperm.xlu0 %415, %v83
      %v417 = vpop.permute.xlu0 %416
      %419 = vset.pattern.permute.xlu0 6
      %420 = vperm.xlu0 %419, %v84
      %v421 = vpop.permute.xlu0 %420
      %423 = vset.pattern.permute.xlu0 6
      %424 = vperm.xlu0 %423, %v85
      %v425 = vpop.permute.xlu0 %424
      %427 = vset.pattern.permute.xlu0 6
      %428 = vperm.xlu0 %427, %v86
      %v429 = vpop.permute.xlu0 %428
      %431 = vset.pattern.permute.xlu0 6
      %432 = vperm.xlu0 %431, %v87
      %v433 = vpop.permute.xlu0 %432
      %435 = vset.pattern.permute.xlu0 6
      %436 = vperm.xlu0 %435, %v88
      %v437 = vpop.permute.xlu0 %436
      %439 = vset.pattern.permute.xlu0 6
      %440 = vperm.xlu0 %439, %v89
      %v441 = vpop.permute.xlu0 %440
      %443 = vset.pattern.permute.xlu0 6
      %444 = vperm.xlu0 %443, %v90
      %v445 = vpop.permute.xlu0 %444
      %v447 = vadd.f32 %v414, %v417
      %v448 = vadd.f32 %v414, %v421
      %v449 = vadd.f32 %v414, %v425
      %v450 = vadd.f32 %v414, %v429
      %v451 = vadd.f32 %v414, %v433
      %v452 = vadd.f32 %v414, %v437
      %v453 = vadd.f32 %v414, %v441
      %v454 = vadd.f32 %v414, %v445
      %v455 = vmin.f32 %v403, %v447
      %v456 = vmin.f32 %v404, %v448
      %v457 = vmin.f32 %v405, %v449
      %v458 = vmin.f32 %v406, %v450
      %v459 = vmin.f32 %v407, %v451
      %v460 = vmin.f32 %v408, %v452
      %v461 = vmin.f32 %v409, %v453
      %v462 = vmin.f32 %v410, %v454
      %v463 = vlaneseq
      %v464 = vshrl.u32 %v463, 7
      %v465 = vsub.s32 7, %v464
      %v466 = vrot.slane %v67, %v465
      %467 = vset.pattern.permute.xlu0 7
      %468 = vperm.xlu0 %467, %v83
      %v469 = vpop.permute.xlu0 %468
      %471 = vset.pattern.permute.xlu0 7
      %472 = vperm.xlu0 %471, %v84
      %v473 = vpop.permute.xlu0 %472
      %475 = vset.pattern.permute.xlu0 7
      %476 = vperm.xlu0 %475, %v85
      %v477 = vpop.permute.xlu0 %476
      %479 = vset.pattern.permute.xlu0 7
      %480 = vperm.xlu0 %479, %v86
      %v481 = vpop.permute.xlu0 %480
      %483 = vset.pattern.permute.xlu0 7
      %484 = vperm.xlu0 %483, %v87
      %v485 = vpop.permute.xlu0 %484
      %487 = vset.pattern.permute.xlu0 7
      %488 = vperm.xlu0 %487, %v88
      %v489 = vpop.permute.xlu0 %488
      %491 = vset.pattern.permute.xlu0 7
      %492 = vperm.xlu0 %491, %v89
      %v493 = vpop.permute.xlu0 %492
      %495 = vset.pattern.permute.xlu0 7
      %496 = vperm.xlu0 %495, %v90
      %v497 = vpop.permute.xlu0 %496
      %v499 = vadd.f32 %v466, %v469
      %v500 = vadd.f32 %v466, %v473
      %v501 = vadd.f32 %v466, %v477
      %v502 = vadd.f32 %v466, %v481
      %v503 = vadd.f32 %v466, %v485
      %v504 = vadd.f32 %v466, %v489
      %v505 = vadd.f32 %v466, %v493
      %v506 = vadd.f32 %v466, %v497
      %v507 = vmin.f32 %v455, %v499
      %v508 = vmin.f32 %v456, %v500
      %v509 = vmin.f32 %v457, %v501
      %v510 = vmin.f32 %v458, %v502
      %v511 = vmin.f32 %v459, %v503
      %v512 = vmin.f32 %v460, %v504
      %v513 = vmin.f32 %v461, %v505
      %v514 = vmin.f32 %v462, %v506
      %v515 = vlaneseq
      %v516 = vshrl.u32 %v515, 7
      %v517 = vsub.s32 0, %v516
      %v518 = vrot.slane %v68, %v517
      %519 = vset.pattern.permute.xlu0 8
      %520 = vperm.xlu0 %519, %v83
      %v521 = vpop.permute.xlu0 %520
      %523 = vset.pattern.permute.xlu0 8
      %524 = vperm.xlu0 %523, %v84
      %v525 = vpop.permute.xlu0 %524
      %527 = vset.pattern.permute.xlu0 8
      %528 = vperm.xlu0 %527, %v85
      %v529 = vpop.permute.xlu0 %528
      %531 = vset.pattern.permute.xlu0 8
      %532 = vperm.xlu0 %531, %v86
      %v533 = vpop.permute.xlu0 %532
      %535 = vset.pattern.permute.xlu0 8
      %536 = vperm.xlu0 %535, %v87
      %v537 = vpop.permute.xlu0 %536
      %539 = vset.pattern.permute.xlu0 8
      %540 = vperm.xlu0 %539, %v88
      %v541 = vpop.permute.xlu0 %540
      %543 = vset.pattern.permute.xlu0 8
      %544 = vperm.xlu0 %543, %v89
      %v545 = vpop.permute.xlu0 %544
      %547 = vset.pattern.permute.xlu0 8
      %548 = vperm.xlu0 %547, %v90
      %v549 = vpop.permute.xlu0 %548
      %v551 = vadd.f32 %v518, %v521
      %v552 = vadd.f32 %v518, %v525
      %v553 = vadd.f32 %v518, %v529
      %v554 = vadd.f32 %v518, %v533
      %v555 = vadd.f32 %v518, %v537
      %v556 = vadd.f32 %v518, %v541
      %v557 = vadd.f32 %v518, %v545
      %v558 = vadd.f32 %v518, %v549
      %v559 = vmin.f32 %v507, %v551
      %v560 = vmin.f32 %v508, %v552
      %v561 = vmin.f32 %v509, %v553
      %v562 = vmin.f32 %v510, %v554
      %v563 = vmin.f32 %v511, %v555
      %v564 = vmin.f32 %v512, %v556
      %v565 = vmin.f32 %v513, %v557
      %v566 = vmin.f32 %v514, %v558
      %v567 = vlaneseq
      %v568 = vshrl.u32 %v567, 7
      %v569 = vsub.s32 1, %v568
      %v570 = vrot.slane %v68, %v569
      %571 = vset.pattern.permute.xlu0 9
      %572 = vperm.xlu0 %571, %v83
      %v573 = vpop.permute.xlu0 %572
      %575 = vset.pattern.permute.xlu0 9
      %576 = vperm.xlu0 %575, %v84
      %v577 = vpop.permute.xlu0 %576
      %579 = vset.pattern.permute.xlu0 9
      %580 = vperm.xlu0 %579, %v85
      %v581 = vpop.permute.xlu0 %580
      %583 = vset.pattern.permute.xlu0 9
      %584 = vperm.xlu0 %583, %v86
      %v585 = vpop.permute.xlu0 %584
      %587 = vset.pattern.permute.xlu0 9
      %588 = vperm.xlu0 %587, %v87
      %v589 = vpop.permute.xlu0 %588
      %591 = vset.pattern.permute.xlu0 9
      %592 = vperm.xlu0 %591, %v88
      %v593 = vpop.permute.xlu0 %592
      %595 = vset.pattern.permute.xlu0 9
      %596 = vperm.xlu0 %595, %v89
      %v597 = vpop.permute.xlu0 %596
      %599 = vset.pattern.permute.xlu0 9
      %600 = vperm.xlu0 %599, %v90
      %v601 = vpop.permute.xlu0 %600
      %v603 = vadd.f32 %v570, %v573
      %v604 = vadd.f32 %v570, %v577
      %v605 = vadd.f32 %v570, %v581
      %v606 = vadd.f32 %v570, %v585
      %v607 = vadd.f32 %v570, %v589
      %v608 = vadd.f32 %v570, %v593
      %v609 = vadd.f32 %v570, %v597
      %v610 = vadd.f32 %v570, %v601
      %v611 = vmin.f32 %v559, %v603
      %v612 = vmin.f32 %v560, %v604
      %v613 = vmin.f32 %v561, %v605
      %v614 = vmin.f32 %v562, %v606
      %v615 = vmin.f32 %v563, %v607
      %v616 = vmin.f32 %v564, %v608
      %v617 = vmin.f32 %v565, %v609
      %v618 = vmin.f32 %v566, %v610
      %v619 = vlaneseq
      %v620 = vshrl.u32 %v619, 7
      %v621 = vsub.s32 2, %v620
      %v622 = vrot.slane %v68, %v621
      %623 = vset.pattern.permute.xlu0 10
      %624 = vperm.xlu0 %623, %v83
      %v625 = vpop.permute.xlu0 %624
      %627 = vset.pattern.permute.xlu0 10
      %628 = vperm.xlu0 %627, %v84
      %v629 = vpop.permute.xlu0 %628
      %631 = vset.pattern.permute.xlu0 10
      %632 = vperm.xlu0 %631, %v85
      %v633 = vpop.permute.xlu0 %632
      %635 = vset.pattern.permute.xlu0 10
      %636 = vperm.xlu0 %635, %v86
      %v637 = vpop.permute.xlu0 %636
      %639 = vset.pattern.permute.xlu0 10
      %640 = vperm.xlu0 %639, %v87
      %v641 = vpop.permute.xlu0 %640
      %643 = vset.pattern.permute.xlu0 10
      %644 = vperm.xlu0 %643, %v88
      %v645 = vpop.permute.xlu0 %644
      %647 = vset.pattern.permute.xlu0 10
      %648 = vperm.xlu0 %647, %v89
      %v649 = vpop.permute.xlu0 %648
      %651 = vset.pattern.permute.xlu0 10
      %652 = vperm.xlu0 %651, %v90
      %v653 = vpop.permute.xlu0 %652
      %v655 = vadd.f32 %v622, %v625
      %v656 = vadd.f32 %v622, %v629
      %v657 = vadd.f32 %v622, %v633
      %v658 = vadd.f32 %v622, %v637
      %v659 = vadd.f32 %v622, %v641
      %v660 = vadd.f32 %v622, %v645
      %v661 = vadd.f32 %v622, %v649
      %v662 = vadd.f32 %v622, %v653
      %v663 = vmin.f32 %v611, %v655
      %v664 = vmin.f32 %v612, %v656
      %v665 = vmin.f32 %v613, %v657
      %v666 = vmin.f32 %v614, %v658
      %v667 = vmin.f32 %v615, %v659
      %v668 = vmin.f32 %v616, %v660
      %v669 = vmin.f32 %v617, %v661
      %v670 = vmin.f32 %v618, %v662
      %v671 = vlaneseq
      %v672 = vshrl.u32 %v671, 7
      %v673 = vsub.s32 3, %v672
      %v674 = vrot.slane %v68, %v673
      %675 = vset.pattern.permute.xlu0 11
      %676 = vperm.xlu0 %675, %v83
      %v677 = vpop.permute.xlu0 %676
      %679 = vset.pattern.permute.xlu0 11
      %680 = vperm.xlu0 %679, %v84
      %v681 = vpop.permute.xlu0 %680
      %683 = vset.pattern.permute.xlu0 11
      %684 = vperm.xlu0 %683, %v85
      %v685 = vpop.permute.xlu0 %684
      %687 = vset.pattern.permute.xlu0 11
      %688 = vperm.xlu0 %687, %v86
      %v689 = vpop.permute.xlu0 %688
      %691 = vset.pattern.permute.xlu0 11
      %692 = vperm.xlu0 %691, %v87
      %v693 = vpop.permute.xlu0 %692
      %695 = vset.pattern.permute.xlu0 11
      %696 = vperm.xlu0 %695, %v88
      %v697 = vpop.permute.xlu0 %696
      %699 = vset.pattern.permute.xlu0 11
      %700 = vperm.xlu0 %699, %v89
      %v701 = vpop.permute.xlu0 %700
      %703 = vset.pattern.permute.xlu0 11
      %704 = vperm.xlu0 %703, %v90
      %v705 = vpop.permute.xlu0 %704
      %v707 = vadd.f32 %v674, %v677
      %v708 = vadd.f32 %v674, %v681
      %v709 = vadd.f32 %v674, %v685
      %v710 = vadd.f32 %v674, %v689
      %v711 = vadd.f32 %v674, %v693
      %v712 = vadd.f32 %v674, %v697
      %v713 = vadd.f32 %v674, %v701
      %v714 = vadd.f32 %v674, %v705
      %v715 = vmin.f32 %v663, %v707
      %v716 = vmin.f32 %v664, %v708
      %v717 = vmin.f32 %v665, %v709
      %v718 = vmin.f32 %v666, %v710
      %v719 = vmin.f32 %v667, %v711
      %v720 = vmin.f32 %v668, %v712
      %v721 = vmin.f32 %v669, %v713
      %v722 = vmin.f32 %v670, %v714
      %v723 = vlaneseq
      %v724 = vshrl.u32 %v723, 7
      %v725 = vsub.s32 4, %v724
      %v726 = vrot.slane %v68, %v725
      %727 = vset.pattern.permute.xlu0 12
      %728 = vperm.xlu0 %727, %v83
      %v729 = vpop.permute.xlu0 %728
      %731 = vset.pattern.permute.xlu0 12
      %732 = vperm.xlu0 %731, %v84
      %v733 = vpop.permute.xlu0 %732
      %735 = vset.pattern.permute.xlu0 12
      %736 = vperm.xlu0 %735, %v85
      %v737 = vpop.permute.xlu0 %736
      %739 = vset.pattern.permute.xlu0 12
      %740 = vperm.xlu0 %739, %v86
      %v741 = vpop.permute.xlu0 %740
      %743 = vset.pattern.permute.xlu0 12
      %744 = vperm.xlu0 %743, %v87
      %v745 = vpop.permute.xlu0 %744
      %747 = vset.pattern.permute.xlu0 12
      %748 = vperm.xlu0 %747, %v88
      %v749 = vpop.permute.xlu0 %748
      %751 = vset.pattern.permute.xlu0 12
      %752 = vperm.xlu0 %751, %v89
      %v753 = vpop.permute.xlu0 %752
      %755 = vset.pattern.permute.xlu0 12
      %756 = vperm.xlu0 %755, %v90
      %v757 = vpop.permute.xlu0 %756
      %v759 = vadd.f32 %v726, %v729
      %v760 = vadd.f32 %v726, %v733
      %v761 = vadd.f32 %v726, %v737
      %v762 = vadd.f32 %v726, %v741
      %v763 = vadd.f32 %v726, %v745
      %v764 = vadd.f32 %v726, %v749
      %v765 = vadd.f32 %v726, %v753
      %v766 = vadd.f32 %v726, %v757
      %v767 = vmin.f32 %v715, %v759
      %v768 = vmin.f32 %v716, %v760
      %v769 = vmin.f32 %v717, %v761
      %v770 = vmin.f32 %v718, %v762
      %v771 = vmin.f32 %v719, %v763
      %v772 = vmin.f32 %v720, %v764
      %v773 = vmin.f32 %v721, %v765
      %v774 = vmin.f32 %v722, %v766
      %v775 = vlaneseq
      %v776 = vshrl.u32 %v775, 7
      %v777 = vsub.s32 5, %v776
      %v778 = vrot.slane %v68, %v777
      %779 = vset.pattern.permute.xlu0 13
      %780 = vperm.xlu0 %779, %v83
      %v781 = vpop.permute.xlu0 %780
      %783 = vset.pattern.permute.xlu0 13
      %784 = vperm.xlu0 %783, %v84
      %v785 = vpop.permute.xlu0 %784
      %787 = vset.pattern.permute.xlu0 13
      %788 = vperm.xlu0 %787, %v85
      %v789 = vpop.permute.xlu0 %788
      %791 = vset.pattern.permute.xlu0 13
      %792 = vperm.xlu0 %791, %v86
      %v793 = vpop.permute.xlu0 %792
      %795 = vset.pattern.permute.xlu0 13
      %796 = vperm.xlu0 %795, %v87
      %v797 = vpop.permute.xlu0 %796
      %799 = vset.pattern.permute.xlu0 13
      %800 = vperm.xlu0 %799, %v88
      %v801 = vpop.permute.xlu0 %800
      %803 = vset.pattern.permute.xlu0 13
      %804 = vperm.xlu0 %803, %v89
      %v805 = vpop.permute.xlu0 %804
      %807 = vset.pattern.permute.xlu0 13
      %808 = vperm.xlu0 %807, %v90
      %v809 = vpop.permute.xlu0 %808
      %v811 = vadd.f32 %v778, %v781
      %v812 = vadd.f32 %v778, %v785
      %v813 = vadd.f32 %v778, %v789
      %v814 = vadd.f32 %v778, %v793
      %v815 = vadd.f32 %v778, %v797
      %v816 = vadd.f32 %v778, %v801
      %v817 = vadd.f32 %v778, %v805
      %v818 = vadd.f32 %v778, %v809
      %v819 = vmin.f32 %v767, %v811
      %v820 = vmin.f32 %v768, %v812
      %v821 = vmin.f32 %v769, %v813
      %v822 = vmin.f32 %v770, %v814
      %v823 = vmin.f32 %v771, %v815
      %v824 = vmin.f32 %v772, %v816
      %v825 = vmin.f32 %v773, %v817
      %v826 = vmin.f32 %v774, %v818
      %v827 = vlaneseq
      %v828 = vshrl.u32 %v827, 7
      %v829 = vsub.s32 6, %v828
      %v830 = vrot.slane %v68, %v829
      %831 = vset.pattern.permute.xlu0 14
      %832 = vperm.xlu0 %831, %v83
      %v833 = vpop.permute.xlu0 %832
      %835 = vset.pattern.permute.xlu0 14
      %836 = vperm.xlu0 %835, %v84
      %v837 = vpop.permute.xlu0 %836
      %839 = vset.pattern.permute.xlu0 14
      %840 = vperm.xlu0 %839, %v85
      %v841 = vpop.permute.xlu0 %840
      %843 = vset.pattern.permute.xlu0 14
      %844 = vperm.xlu0 %843, %v86
      %v845 = vpop.permute.xlu0 %844
      %847 = vset.pattern.permute.xlu0 14
      %848 = vperm.xlu0 %847, %v87
      %v849 = vpop.permute.xlu0 %848
      %851 = vset.pattern.permute.xlu0 14
      %852 = vperm.xlu0 %851, %v88
      %v853 = vpop.permute.xlu0 %852
      %855 = vset.pattern.permute.xlu0 14
      %856 = vperm.xlu0 %855, %v89
      %v857 = vpop.permute.xlu0 %856
      %859 = vset.pattern.permute.xlu0 14
      %860 = vperm.xlu0 %859, %v90
      %v861 = vpop.permute.xlu0 %860
      %v863 = vadd.f32 %v830, %v833
      %v864 = vadd.f32 %v830, %v837
      %v865 = vadd.f32 %v830, %v841
      %v866 = vadd.f32 %v830, %v845
      %v867 = vadd.f32 %v830, %v849
      %v868 = vadd.f32 %v830, %v853
      %v869 = vadd.f32 %v830, %v857
      %v870 = vadd.f32 %v830, %v861
      %v871 = vmin.f32 %v819, %v863
      %v872 = vmin.f32 %v820, %v864
      %v873 = vmin.f32 %v821, %v865
      %v874 = vmin.f32 %v822, %v866
      %v875 = vmin.f32 %v823, %v867
      %v876 = vmin.f32 %v824, %v868
      %v877 = vmin.f32 %v825, %v869
      %v878 = vmin.f32 %v826, %v870
      %v879 = vlaneseq
      %v880 = vshrl.u32 %v879, 7
      %v881 = vsub.s32 7, %v880
      %v882 = vrot.slane %v68, %v881
      %883 = vset.pattern.permute.xlu0 15
      %884 = vperm.xlu0 %883, %v83
      %v885 = vpop.permute.xlu0 %884
      %887 = vset.pattern.permute.xlu0 15
      %888 = vperm.xlu0 %887, %v84
      %v889 = vpop.permute.xlu0 %888
      %891 = vset.pattern.permute.xlu0 15
      %892 = vperm.xlu0 %891, %v85
      %v893 = vpop.permute.xlu0 %892
      %895 = vset.pattern.permute.xlu0 15
      %896 = vperm.xlu0 %895, %v86
      %v897 = vpop.permute.xlu0 %896
      %899 = vset.pattern.permute.xlu0 15
      %900 = vperm.xlu0 %899, %v87
      %v901 = vpop.permute.xlu0 %900
      %903 = vset.pattern.permute.xlu0 15
      %904 = vperm.xlu0 %903, %v88
      %v905 = vpop.permute.xlu0 %904
      %907 = vset.pattern.permute.xlu0 15
      %908 = vperm.xlu0 %907, %v89
      %v909 = vpop.permute.xlu0 %908
      %911 = vset.pattern.permute.xlu0 15
      %912 = vperm.xlu0 %911, %v90
      %v913 = vpop.permute.xlu0 %912
      %v915 = vadd.f32 %v882, %v885
      %v916 = vadd.f32 %v882, %v889
      %v917 = vadd.f32 %v882, %v893
      %v918 = vadd.f32 %v882, %v897
      %v919 = vadd.f32 %v882, %v901
      %v920 = vadd.f32 %v882, %v905
      %v921 = vadd.f32 %v882, %v909
      %v922 = vadd.f32 %v882, %v913
      %v923 = vmin.f32 %v871, %v915
      %v924 = vmin.f32 %v872, %v916
      %v925 = vmin.f32 %v873, %v917
      %v926 = vmin.f32 %v874, %v918
      %v927 = vmin.f32 %v875, %v919
      %v928 = vmin.f32 %v876, %v920
      %v929 = vmin.f32 %v877, %v921
      %v930 = vmin.f32 %v878, %v922
    $region18: #{diff_optimize_forward.1} parent=1 // loop_footer
      %s40 = sadd.s32 1, %s36
    $region19: #{diff_optimize_forward.1} parent=1 // loop_footer_branch
      %35 = sbr.rel target = $region15
    $region20: #{diff_optimize_forward.1} parent=1 // loop_exit
      _
    %v931 = vmul.f32 %v41, -0.22222222
    %v932 = vmul.f32 %v42, -0.22222222
    %v933 = vmul.f32 %v43, -0.22222222
    %v934 = vmul.f32 %v44, -0.22222222
    %v935 = vmul.f32 %v45, -0.22222222
    %v936 = vmul.f32 %v46, -0.22222222
    %v937 = vmul.f32 %v47, -0.22222222
    %v938 = vmul.f32 %v48, -0.22222222
    %v939 = vmul.f32 %v931, 1.442695
    %v940 = vpow.pop %v939
    %v941 = vmul.f32 %v932, 1.442695
    %v942 = vpow.pop %v941
    %v943 = vmul.f32 %v933, 1.442695
    %v944 = vpow.pop %v943
    %v945 = vmul.f32 %v934, 1.442695
    %v946 = vpow.pop %v945
    %v947 = vmul.f32 %v935, 1.442695
    %v948 = vpow.pop %v947
    %v949 = vmul.f32 %v936, 1.442695
    %v950 = vpow.pop %v949
    %v951 = vmul.f32 %v937, 1.442695
    %v952 = vpow.pop %v951
    %v953 = vmul.f32 %v938, 1.442695
    %v954 = vpow.pop %v953
    %v955 = vsub.f32 %v940, 0.5
    %v956 = vsub.f32 %v942, 0.5
    %v957 = vsub.f32 %v944, 0.5
    %v958 = vsub.f32 %v946, 0.5
    %v959 = vsub.f32 %v948, 0.5
    %v960 = vsub.f32 %v950, 0.5
    %v961 = vsub.f32 %v952, 0.5
    %v962 = vsub.f32 %v954, 0.5
    %v963 = vmul.f32 %v955, -20.0
    %v964 = vmul.f32 %v956, -20.0
    %v965 = vmul.f32 %v957, -20.0
    %v966 = vmul.f32 %v958, -20.0
    %v967 = vmul.f32 %v959, -20.0
    %v968 = vmul.f32 %v960, -20.0
    %v969 = vmul.f32 %v961, -20.0
    %v970 = vmul.f32 %v962, -20.0
    %v971 = vmul.f32 %v963, 1.442695
    %v972 = vpow.pop %v971
    %v973 = vmul.f32 %v964, 1.442695
    %v974 = vpow.pop %v973
    %v975 = vmul.f32 %v965, 1.442695
    %v976 = vpow.pop %v975
    %v977 = vmul.f32 %v966, 1.442695
    %v978 = vpow.pop %v977
    %v979 = vmul.f32 %v967, 1.442695
    %v980 = vpow.pop %v979
    %v981 = vmul.f32 %v968, 1.442695
    %v982 = vpow.pop %v981
    %v983 = vmul.f32 %v969, 1.442695
    %v984 = vpow.pop %v983
    %v985 = vmul.f32 %v970, 1.442695
    %v986 = vpow.pop %v985
    %v987 = vadd.f32 %v972, 1.0
    %v988 = vadd.f32 %v974, 1.0
    %v989 = vadd.f32 %v976, 1.0
    %v990 = vadd.f32 %v978, 1.0
    %v991 = vadd.f32 %v980, 1.0
    %v992 = vadd.f32 %v982, 1.0
    %v993 = vadd.f32 %v984, 1.0
    %v994 = vadd.f32 %v986, 1.0
    %v995 = vrcp.pop %v987
    %v996 = vmul.f32 1.0, %v995
    %v997 = vrcp.pop %v988
    %v998 = vmul.f32 1.0, %v997
    %v999 = vrcp.pop %v989
    %v1000 = vmul.f32 1.0, %v999
    %v1001 = vrcp.pop %v990
    %v1002 = vmul.f32 1.0, %v1001
    %v1003 = vrcp.pop %v991
    %v1004 = vmul.f32 1.0, %v1003
    %v1005 = vrcp.pop %v992
    %v1006 = vmul.f32 1.0, %v1005
    %v1007 = vrcp.pop %v993
    %v1008 = vmul.f32 1.0, %v1007
    %v1009 = vrcp.pop %v994
    %v1010 = vmul.f32 1.0, %v1009
    %v1011 = vld [vmem:[%s2] sm:$0xff]
    %v1012 = vld [vmem:[%s2 + $0x8] sm:$0xff]
    %v1013 = vld [vmem:[%s2 + $0x10] sm:$0xff]
    %v1014 = vld [vmem:[%s2 + $0x18] sm:$0xff]
    %v1015 = vld [vmem:[%s2 + $0x20] sm:$0xff]
    %v1016 = vld [vmem:[%s2 + $0x28] sm:$0xff]
    %v1017 = vld [vmem:[%s2 + $0x30] sm:$0xff]
    %v1018 = vld [vmem:[%s2 + $0x38] sm:$0xff]
    %v1019 = vsub.f32 %v996, %v1011
    %v1020 = vsub.f32 %v998, %v1012
    %v1021 = vsub.f32 %v1000, %v1013
    %v1022 = vsub.f32 %v1002, %v1014
    %v1023 = vsub.f32 %v1004, %v1015
    %v1024 = vsub.f32 %v1006, %v1016
    %v1025 = vsub.f32 %v1008, %v1017
    %v1026 = vsub.f32 %v1010, %v1018
    %v1027 = vmul.f32 %v1019, %v1019
    %v1028 = vmul.f32 %v1020, %v1020
    %v1029 = vmul.f32 %v1021, %v1021
    %v1030 = vmul.f32 %v1022, %v1022
    %v1031 = vmul.f32 %v1023, %v1023
    %v1032 = vmul.f32 %v1024, %v1024
    %v1033 = vmul.f32 %v1025, %v1025
    %v1034 = vmul.f32 %v1026, %v1026
    %1035 = vadd.xlane.f32.xlu0 %v1027
    %v1036 = vpop.xlane.xlu0 %1035
    %1037 = vadd.xlane.f32.xlu0 %v1028
    %v1038 = vpop.xlane.xlu0 %1037
    %1039 = vadd.xlane.f32.xlu0 %v1029
    %v1040 = vpop.xlane.xlu0 %1039
    %1041 = vadd.xlane.f32.xlu0 %v1030
    %v1042 = vpop.xlane.xlu0 %1041
    %1043 = vadd.xlane.f32.xlu0 %v1031
    %v1044 = vpop.xlane.xlu0 %1043
    %1045 = vadd.xlane.f32.xlu0 %v1032
    %v1046 = vpop.xlane.xlu0 %1045
    %1047 = vadd.xlane.f32.xlu0 %v1033
    %v1048 = vpop.xlane.xlu0 %1047
    %1049 = vadd.xlane.f32.xlu0 %v1034
    %v1050 = vpop.xlane.xlu0 %1049
    %v1051 = vadd.f32 %v1036, %v1038
    %v1052 = vadd.f32 %v1051, %v1040
    %v1053 = vadd.f32 %v1052, %v1042
    %v1054 = vadd.f32 %v1053, %v1044
    %v1055 = vadd.f32 %v1054, %v1046
    %v1056 = vadd.f32 %v1055, %v1048
    %v1057 = vadd.f32 %v1056, %v1050
    %v1058 = vrot.slane %v1057, 4
    %v1059 = vadd.f32 %v1057, %v1058
    %v1060 = vrot.slane %v1059, 2
    %v1061 = vadd.f32 %v1059, %v1060
    %v1062 = vrot.slane %v1061, 1
    %v1063 = vadd.f32 %v1061, %v1062
    %vm1064 = vcmask 0
    %1065 = vst.msk [vmem:[#allocation2] sm:$0x1] %vm1064, %v1063
    // Predicated region
    $region21: #{diff_optimize_forward.1} parent=1 // pred_check
      _
    $region22: #{diff_optimize_forward.1} parent=1 // pred_check_branch
      %1067 = sbr.rel (0) target = $region24
    $region23: #{diff_optimize_forward.1} parent=1 // pred_region
      %s1069 = ssub.s32 16, 16
      %1070 = vsyncadd [#allocation3], %s1069
      %s1072 = sshll.u32 [#allocation2], 4
      %s1073 = int_to_ptr.vmem [resolvable:$true] %s1072
      %1075 = dma.vmem_to_hbm [thread:$0]  %s1073, 16, %s3, [#allocation3]
    $region24: #{diff_optimize_forward.1} parent=1 // pred_fallthru
      _
    // Predicated region
    $region25: #{diff_optimize_forward.1} parent=1 // pred_check
      _
    $region26: #{diff_optimize_forward.1} parent=1 // pred_check_branch
      %1077 = sbr.rel (0) target = $region28
    $region27: #{diff_optimize_forward.1} parent=1 // pred_region
      %1078 = dma.done [#allocation3], 16
    $region28: #{diff_optimize_forward.1} parent=1 // pred_fallthru
      _
    %1079 = vsyncpa [#allocation3], 1

</llo_original>
